<compile_context>
chip_gen: v6e
topology: v6e:2x2x1
jax: 0.10.0
libtpu: 0.0.40
codegen_flags: <defaults>
</compile_context>

<pallas_src>
import functools

import jax
import jax.numpy as jnp
from jax import lax
from jax.experimental import pallas as pl
from jax.experimental.pallas import tpu as pltpu


def _round_up(x, m):
    return ((x + m - 1) // m) * m


# Contract v's n_vis axis (dim 1) with W's n_vis axis (dim 1): (B,K) x (N,K) -> (B,N).
_DIMNUMS = (((1,), (1,)), ((), ()))


def _dot_vwT(v_blk, w_blk, compute_dtype):
    if compute_dtype is not None:
        v_blk = v_blk.astype(compute_dtype)
        w_blk = w_blk.astype(compute_dtype)
    return lax.dot_general(v_blk, w_blk, _DIMNUMS, preferred_element_type=jnp.float32)


def _rbm_kernel_single(v_ref, w_ref, b_ref, o_ref, *, compute_dtype):
    """Whole reduction in one grid step: o = sigmoid(v @ W^T + b)."""
    z = _dot_vwT(v_ref[...], w_ref[...], compute_dtype) + b_ref[...]
    o_ref[...] = jax.nn.sigmoid(z).astype(o_ref.dtype)


def _rbm_kernel_reduce_f32out(v_ref, w_ref, b_ref, o_ref, *, compute_dtype):
    """K-tiled reduction accumulating directly into the resident f32 output block."""
    k = pl.program_id(2)

    @pl.when(k == 0)
    def _():
        o_ref[...] = jnp.zeros_like(o_ref)

    o_ref[...] += _dot_vwT(v_ref[...], w_ref[...], compute_dtype)

    @pl.when(k == pl.num_programs(2) - 1)
    def _():
        o_ref[...] = jax.nn.sigmoid(o_ref[...] + b_ref[...])


def _rbm_kernel_reduce_acc(v_ref, w_ref, b_ref, o_ref, acc_ref, *, compute_dtype):
    """K-tiled reduction with an f32 scratch accumulator (for non-f32 outputs)."""
    k = pl.program_id(2)

    @pl.when(k == 0)
    def _():
        acc_ref[...] = jnp.zeros_like(acc_ref)

    acc_ref[...] += _dot_vwT(v_ref[...], w_ref[...], compute_dtype)

    @pl.when(k == pl.num_programs(2) - 1)
    def _():
        o_ref[...] = jax.nn.sigmoid(acc_ref[...] + b_ref[...]).astype(o_ref.dtype)


@functools.partial(jax.jit, static_argnames=("compute_dtype",))
def rbm_forward(v, W, h_bias, *, compute_dtype=None):
    """Equivalent of torch.sigmoid(F.linear(v, W, h_bias)).

    v:      (B, n_vis)
    W:      (n_hid, n_vis)   -- PyTorch convention, never transposed in HBM
    h_bias: (n_hid,)
    compute_dtype: optional MXU input dtype (e.g. jnp.bfloat16); accumulation
                   is always f32.
    returns (B, n_hid)
    """
    B, n_vis = v.shape
    n_hid, n_vis_w = W.shape
    assert n_vis == n_vis_w
    out_dtype = v.dtype

    # ---- tile selection (all tiles (8,128)-aligned; no masking needed) ----
    # Batch tile: one tile covering the 8-padded batch for small B, else 256.
    m_pad = _round_up(B, 8)
    if m_pad <= 256:
        tm = m_pad
    else:
        tm = 256
        m_pad = _round_up(B, tm)

    # Hidden (output lane) tile: lane-dense multiple of 128, as large as divides.
    n_pad = _round_up(n_hid, 128)
    tn = next(t for t in (512, 256, 128) if n_pad % t == 0)

    # Reduction tile: collapse the K axis entirely when it fits comfortably,
    # otherwise step through 2048-deep K tiles.
    k_pad = _round_up(n_vis, 128)
    if k_pad <= 2048:
        tk = k_pad
    else:
        tk = 2048
        k_pad = _round_up(n_vis, tk)

    # ---- zero-pad to tile multiples (zeros contribute nothing to the dot;
    #      padded rows/cols are sliced off the output). No-op when divisible. ----
    if (m_pad, k_pad) != (B, n_vis):
        v = jnp.pad(v, ((0, m_pad - B), (0, k_pad - n_vis)))
    if (n_pad, k_pad) != (n_hid, n_vis):
        W = jnp.pad(W, ((0, n_pad - n_hid), (0, k_pad - n_vis)))
    bias = h_bias if n_pad == n_hid else jnp.pad(h_bias, (0, n_pad - n_hid))
    bias = bias.reshape(1, n_pad)

    grid_m = m_pad // tm
    grid_n = n_pad // tn
    grid_k = k_pad // tk

    if grid_k == 1:
        # 2D grid, no accumulator, no init/finalize phases.
        grid = (grid_m, grid_n)
        kernel = functools.partial(_rbm_kernel_single, compute_dtype=compute_dtype)
        in_specs = [
            pl.BlockSpec((tm, tk), lambda i, j: (i, 0)),   # v tile
            pl.BlockSpec((tn, tk), lambda i, j: (j, 0)),   # W tile (PyTorch layout)
            pl.BlockSpec((1, tn), lambda i, j: (0, j)),    # bias tile
        ]
        out_spec = pl.BlockSpec((tm, tn), lambda i, j: (i, j))
        scratch = []
        dim_sem = ("parallel", "parallel")
    else:
        # 3D grid; reduction axis last and marked "arbitrary".
        grid = (grid_m, grid_n, grid_k)
        in_specs = [
            pl.BlockSpec((tm, tk), lambda i, j, k: (i, k)),
            pl.BlockSpec((tn, tk), lambda i, j, k: (j, k)),
            pl.BlockSpec((1, tn), lambda i, j, k: (0, j)),
        ]
        out_spec = pl.BlockSpec((tm, tn), lambda i, j, k: (i, j))
        dim_sem = ("parallel", "parallel", "arbitrary")
        if out_dtype == jnp.float32:
            # Accumulate directly into the resident f32 output block (no scratch).
            kernel = functools.partial(
                _rbm_kernel_reduce_f32out, compute_dtype=compute_dtype)
            scratch = []
        else:
            kernel = functools.partial(
                _rbm_kernel_reduce_acc, compute_dtype=compute_dtype)
            scratch = [pltpu.VMEM((tm, tn), jnp.float32)]

    out = pl.pallas_call(
        kernel,
        out_shape=jax.ShapeDtypeStruct((m_pad, n_pad), out_dtype),
        grid_spec=pltpu.PrefetchScalarGridSpec(
            num_scalar_prefetch=0,
            grid=grid,
            in_specs=in_specs,
            out_specs=out_spec,
            scratch_shapes=scratch,
        ),
        compiler_params=pltpu.CompilerParams(dimension_semantics=dim_sem),
    )(v, W, bias)

    if (m_pad, n_pad) != (B, n_hid):
        out = out[:B, :n_hid]
    return out


if __name__ == "__main__":
    key = jax.random.PRNGKey(0)
    k_w, k_v, k_w2, k_v2 = jax.random.split(key, 4)

    # Deterministic synthetic parameters mirroring RBM.__init__ shapes.
    n_vis, n_hid, batch = 256, 128, 8
    W = 0.1 * jax.random.normal(k_w, (n_hid, n_vis), dtype=jnp.float32)
    h_bias = jnp.zeros((n_hid,), dtype=jnp.float32)
    v_bias = jnp.zeros((n_vis,), dtype=jnp.float32)  # unused in forward()
    # TODO(synk): self.projection (Linear(768, n_hid)) and content_embeddings are
    # only used in cosine-similarity helpers, not in forward(); not implemented.
    v = jax.random.normal(k_v, (batch, n_vis), dtype=jnp.float32)

    ref = jax.nn.sigmoid(
        lax.dot_general(v, W, _DIMNUMS, precision=jax.lax.Precision.HIGHEST) + h_bias)

    # f32 path (single-K kernel, no scratch).
    out = jax.block_until_ready(rbm_forward(v, W, h_bias))
    assert out.shape == (batch, n_hid)
    assert jnp.allclose(out, ref, atol=2e-5, rtol=2e-5)

    # bf16-MXU path (f32 accumulation), looser tolerance.
    out_bf16 = jax.block_until_ready(
        rbm_forward(v, W, h_bias, compute_dtype=jnp.bfloat16))
    assert jnp.allclose(out_bf16, ref, atol=5e-2, rtol=5e-2)

    # Non-divisible shapes exercise zero-padding + the K-tiled reduction kernel.
    n_vis2, n_hid2, batch2 = 3000, 200, 12
    W2 = 0.1 * jax.random.normal(k_w2, (n_hid2, n_vis2), dtype=jnp.float32)
    b2 = 0.01 * jnp.arange(n_hid2, dtype=jnp.float32)
    v2 = jax.random.normal(k_v2, (batch2, n_vis2), dtype=jnp.float32)
    out2 = jax.block_until_ready(rbm_forward(v2, W2, b2))
    ref2 = jax.nn.sigmoid(
        lax.dot_general(v2, W2, _DIMNUMS, precision=jax.lax.Precision.HIGHEST) + b2)
    assert out2.shape == (batch2, n_hid2)
    assert jnp.allclose(out2, ref2, atol=1e-4, rtol=1e-4)

    print("KERNEL_OK")
</pallas_src>

<mosaic_0001>
module attributes {stable_mosaic.version = 11 : i64} {
  func.func @_rbm_kernel_single(%arg0: i32, %arg1: i32, %arg2: memref<8x256xf32, #tpu.memory_space<vmem>>, %arg3: memref<128x256xf32, #tpu.memory_space<vmem>>, %arg4: memref<1x128xf32, #tpu.memory_space<vmem>>, %arg5: memref<8x128xf32, #tpu.memory_space<vmem>>) attributes {dimension_semantics = [#tpu.dimension_semantics<parallel>, #tpu.dimension_semantics<parallel>], iteration_bounds = array<i64: 1, 1>, scalar_prefetch = 0 : i64, scratch_operands = 0 : i64, tpu.core_type = #tpu.core_type<tc>, window_params = [{transform_indices = @transform_0, window_bounds = array<i64: 8, 256>}, {transform_indices = @transform_1, window_bounds = array<i64: 128, 256>}, {transform_indices = @transform_2, window_bounds = array<i64: 1, 128>}, {transform_indices = @transform_3, window_bounds = array<i64: 8, 128>}]} {
    %c0 = arith.constant 0 : index
    %c0_0 = arith.constant 0 : index
    %0 = vector.load %arg2[%c0, %c0_0] : memref<8x256xf32, #tpu.memory_space<vmem>>, vector<8x256xf32>
    %c0_1 = arith.constant 0 : index
    %c0_2 = arith.constant 0 : index
    %1 = vector.load %arg3[%c0_1, %c0_2] : memref<128x256xf32, #tpu.memory_space<vmem>>, vector<128x256xf32>
    %cst = arith.constant dense<0.000000e+00> : vector<8x128xf32>
    %2 = tpu.matmul %0, %1, %cst {dimension_numbers = #tpu.dot_dimension_numbers<[1], [1], [0], [0], [0, 0, 1, 0], [], []>} : vector<8x256xf32>, vector<128x256xf32>, vector<8x128xf32> -> vector<8x128xf32>
    %c0_3 = arith.constant 0 : index
    %c0_4 = arith.constant 0 : index
    %3 = vector.load %arg4[%c0_3, %c0_4] : memref<1x128xf32, #tpu.memory_space<vmem>>, vector<1x128xf32>
    %4 = vector.broadcast %3 : vector<1x128xf32> to vector<8x128xf32>
    %5 = arith.addf %2, %4 : vector<8x128xf32>
    %6 = arith.negf %5 : vector<8x128xf32>
    %7 = math.exp %6 : vector<8x128xf32>
    %cst_5 = arith.constant 1.000000e+00 : f32
    %8 = vector.broadcast %cst_5 : f32 to vector<8x128xf32>
    %9 = arith.addf %8, %7 : vector<8x128xf32>
    %10 = arith.divf %8, %9 : vector<8x128xf32>
    %c0_6 = arith.constant 0 : index
    %c0_7 = arith.constant 0 : index
    %11 = vector.load %arg5[%c0_6, %c0_7] : memref<8x128xf32, #tpu.memory_space<vmem>>, vector<8x128xf32>
    tpu.vector_store %arg5[%c0_6, %c0_7], %10 {strides = array<i32>} : memref<8x128xf32, #tpu.memory_space<vmem>>, vector<8x128xf32>,
    return
  }
  func.func @transform_0(%arg0: i32, %arg1: i32) -> (i32, i32) {
    %c0_i32 = arith.constant 0 : i32
    %c0_i32_0 = arith.constant 0 : i32
    return %arg0, %c0_i32 : i32, i32
  }
  func.func @transform_1(%arg0: i32, %arg1: i32) -> (i32, i32) {
    %c0_i32 = arith.constant 0 : i32
    %c0_i32_0 = arith.constant 0 : i32
    return %arg1, %c0_i32 : i32, i32
  }
  func.func @transform_2(%arg0: i32, %arg1: i32) -> (i32, i32) {
    %c0_i32 = arith.constant 0 : i32
    %c0_i32_0 = arith.constant 0 : i32
    return %c0_i32, %arg1 : i32, i32
  }
  func.func @transform_3(%arg0: i32, %arg1: i32) -> (i32, i32) {
    %c0_i32 = arith.constant 0 : i32
    return %arg0, %arg1 : i32, i32
  }
}

</mosaic_0001>

<llo_original>
// kernel: rbm_forward.1
$region0: #{rbm_forward.1}
  #allocation0 [shape = 'u32[]', space=smem, size = 0x4, offset = 0x4, fixed_abs, tag = 'smem constant byte address 0x4 - core index']
  #allocation1 [shape = 'u32[144,128]{1,0:T(1,128)}', space=vmem, size = 0x12000, scoped, tag = 'internal scratch']
  %s0 = inlined_call_operand.hbm [shape: f32[8,256], index: 0, kind: input, shape index: {}]
  %s1 = inlined_call_operand.hbm [shape: f32[128,256], index: 1, kind: input, shape index: {}]
  %s2 = inlined_call_operand.vmem [shape: f32[1,128], index: 2, kind: input, shape index: {}]
  %s3 = inlined_call_operand.hbm [shape: f32[8,128], index: 3, kind: output, shape index: {}]
  %s4 = sld [smem:[#allocation0]]
  $region30: #{rbm_forward.1} parent=0
    _
  %s6 = ssub.s32 1, %s4
  %s7 = scalar_select 0, %s6, %s4
  $region1: #{rbm_forward.1} parent=0
    #allocation2 [shape = 'u8[8192]{0}', space=vmem, size = 0x2000, scoped, tag = 'input window, operand 0, single buffered']
    #allocation3 [shape = 's32[1]{0}', space=sflag, size = 0x4, scoped, tag = 'scoped memory for rbm_forward.1']
    #allocation4 [shape = 's32[1]{0}', space=sflag, size = 0x4, scoped, tag = 'scoped memory for rbm_forward.1']
    #allocation5 [shape = 'u8[131072]{0}', space=vmem, size = 0x20000, scoped, tag = 'input window, operand 1, single buffered']
    #allocation6 [shape = 's32[1]{0}', space=sflag, size = 0x4, scoped, tag = 'scoped memory for rbm_forward.1']
    #allocation7 [shape = 'u8[4096]{0}', space=vmem, size = 0x1000, scoped, tag = 'output window, operand 0, single buffered']
    %8 = vsyncpa [#allocation3], 0
    %9 = vsyncpa [#allocation6], 0
    %10 = vsyncpa [#allocation4], 0
    // Predicated region
    $region2: #{rbm_forward.1} parent=1 // pred_check
      _
    $region3: #{rbm_forward.1} parent=1 // pred_check_branch
      %12 = sbr.rel (0) target = $region5
    $region4: #{rbm_forward.1} parent=1 // pred_region
      %s14 = ssub.s32 256, 256
      %15 = vsyncadd [#allocation3], %s14
      %s17 = sshll.u32 [#allocation2], 4
      %s18 = int_to_ptr.vmem [resolvable:$true] %s17
      %20 = dma.hbm_to_vmem [thread:$0]  %s0, 256, %s18, [#allocation3]
    $region5: #{rbm_forward.1} parent=1 // pred_fallthru
      _
    // Predicated region
    $region6: #{rbm_forward.1} parent=1 // pred_check
      _
    $region7: #{rbm_forward.1} parent=1 // pred_check_branch
      %22 = sbr.rel (0) target = $region9
    $region8: #{rbm_forward.1} parent=1 // pred_region
      %s24 = ssub.s32 4096, 4096
      %25 = vsyncadd [#allocation6], %s24
      %s26 = sshll.u32 [#allocation5], 4
      %s27 = int_to_ptr.vmem [resolvable:$true] %s26
      %32 = dma.hbm_to_vmem [thread:$0]  %s1, 4096, %s27, [#allocation6], 256, 256, 16
    $region9: #{rbm_forward.1} parent=1 // pred_fallthru
      _
    // Predicated region
    $region10: #{rbm_forward.1} parent=1 // pred_check
      _
    $region11: #{rbm_forward.1} parent=1 // pred_check_branch
      %34 = sbr.rel (0) target = $region13
    $region12: #{rbm_forward.1} parent=1 // pred_region
      _
    $region13: #{rbm_forward.1} parent=1 // pred_fallthru
      _
    // Predicated region
    $region14: #{rbm_forward.1} parent=1 // pred_check
      _
    $region15: #{rbm_forward.1} parent=1 // pred_check_branch
      %36 = sbr.rel (0) target = $region17
    $region16: #{rbm_forward.1} parent=1 // pred_region
      %37 = dma.done [#allocation3], 256
    $region17: #{rbm_forward.1} parent=1 // pred_fallthru
      _
    // Predicated region
    $region18: #{rbm_forward.1} parent=1 // pred_check
      _
    $region19: #{rbm_forward.1} parent=1 // pred_check_branch
      %39 = sbr.rel (0) target = $region21
    $region20: #{rbm_forward.1} parent=1 // pred_region
      %40 = dma.done [#allocation6], 4096
    $region21: #{rbm_forward.1} parent=1 // pred_fallthru
      _
    %v41 = vld [vmem:[#allocation2] sm:$0xff]
    %v42 = vld [vmem:[#allocation2 + $0x8] sm:$0xff]
    %v43 = vld [vmem:[#allocation5] sm:$0xff]
    %v44 = vld [vmem:[#allocation5 + $0x8] sm:$0xff]
    %v45 = vld [vmem:[#allocation5 + $0x10] sm:$0xff]
    %v46 = vld [vmem:[#allocation5 + $0x18] sm:$0xff]
    %v47 = vld [vmem:[#allocation5 + $0x20] sm:$0xff]
    %v48 = vld [vmem:[#allocation5 + $0x28] sm:$0xff]
    %v49 = vld [vmem:[#allocation5 + $0x30] sm:$0xff]
    %v50 = vld [vmem:[#allocation5 + $0x38] sm:$0xff]
    %v51 = vld [vmem:[#allocation5 + $0x40] sm:$0xff]
    %v52 = vld [vmem:[#allocation5 + $0x48] sm:$0xff]
    %v53 = vld [vmem:[#allocation5 + $0x50] sm:$0xff]
    %v54 = vld [vmem:[#allocation5 + $0x58] sm:$0xff]
    %v55 = vld [vmem:[#allocation5 + $0x60] sm:$0xff]
    %v56 = vld [vmem:[#allocation5 + $0x68] sm:$0xff]
    %v57 = vld [vmem:[#allocation5 + $0x70] sm:$0xff]
    %v58 = vld [vmem:[#allocation5 + $0x78] sm:$0xff]
    %v59 = vld [vmem:[#allocation5 + $0x80] sm:$0xff]
    %v60 = vld [vmem:[#allocation5 + $0x88] sm:$0xff]
    %v61 = vld [vmem:[#allocation5 + $0x90] sm:$0xff]
    %v62 = vld [vmem:[#allocation5 + $0x98] sm:$0xff]
    %v63 = vld [vmem:[#allocation5 + $0xa0] sm:$0xff]
    %v64 = vld [vmem:[#allocation5 + $0xa8] sm:$0xff]
    %v65 = vld [vmem:[#allocation5 + $0xb0] sm:$0xff]
    %v66 = vld [vmem:[#allocation5 + $0xb8] sm:$0xff]
    %v67 = vld [vmem:[#allocation5 + $0xc0] sm:$0xff]
    %v68 = vld [vmem:[#allocation5 + $0xc8] sm:$0xff]
    %v69 = vld [vmem:[#allocation5 + $0xd0] sm:$0xff]
    %v70 = vld [vmem:[#allocation5 + $0xd8] sm:$0xff]
    %v71 = vld [vmem:[#allocation5 + $0xe0] sm:$0xff]
    %v72 = vld [vmem:[#allocation5 + $0xe8] sm:$0xff]
    %v73 = vld [vmem:[#allocation5 + $0xf0] sm:$0xff]
    %v74 = vld [vmem:[#allocation5 + $0xf8] sm:$0xff]
    %v75 = vld [vmem:[%s2] sm:$0x1]
    %v77 = vlaneseq
    %v78 = vshrl.u32 %v77, 7
    %v79 = vsub.s32 0, %v78
    %v80 = vrot.slane %v75, %v79
    %82 = vmatprep.subr.mxu0 %v74
    %83 = vmatpush1.xpose.msra.mxu0 %v73
    %84 = vmatprep.subr.mxu0 %v72
    %85 = vmatpush1.xpose.msra.mxu0 %v71
    %86 = vmatprep.subr.mxu0 %v70
    %87 = vmatpush1.xpose.msra.mxu0 %v69
    %88 = vmatprep.subr.mxu0 %v68
    %89 = vmatpush1.xpose.msra.mxu0 %v67
    %90 = vmatprep.subr.mxu0 %v66
    %91 = vmatpush1.xpose.msra.mxu0 %v65
    %92 = vmatprep.subr.mxu0 %v64
    %93 = vmatpush1.xpose.msra.mxu0 %v63
    %94 = vmatprep.subr.mxu0 %v62
    %95 = vmatpush1.xpose.msra.mxu0 %v61
    %96 = vmatprep.subr.mxu0 %v60
    %97 = vmatpush1.xpose.msra.mxu0 %v59
    %98 = vmatprep.subr.mxu0 %v58
    %99 = vmatpush1.xpose.msra.mxu0 %v57
    %100 = vmatprep.subr.mxu0 %v56
    %101 = vmatpush1.xpose.msra.mxu0 %v55
    %102 = vmatprep.subr.mxu0 %v54
    %103 = vmatpush1.xpose.msra.mxu0 %v53
    %104 = vmatprep.subr.mxu0 %v52
    %105 = vmatpush1.xpose.msra.mxu0 %v51
    %106 = vmatprep.subr.mxu0 %v50
    %107 = vmatpush1.xpose.msra.mxu0 %v49
    %108 = vmatprep.subr.mxu0 %v48
    %109 = vmatpush1.xpose.msra.mxu0 %v47
    %110 = vmatprep.subr.mxu0 %v46
    %111 = vmatpush1.xpose.msra.mxu0 %v45
    %112 = vmatprep.subr.mxu0 %v44
    %113 = vmatpush1.xpose.msra.mxu0 %v43
    %114 = vmatprep.subr.mxu0 0.0
    %115 = vmatpush2.xpose.msra.mxu0 0.0
    %116 = vmatprep.subr.mxu0 0.0
    %117 = vmatpush2.xpose.msra.mxu0 0.0
    %118 = vmatprep.subr.mxu0 0.0
    %119 = vmatpush2.xpose.msra.mxu0 0.0
    %120 = vmatprep.subr.mxu0 0.0
    %121 = vmatpush2.xpose.msra.mxu0 0.0
    %122 = vmatprep.subr.mxu0 0.0
    %123 = vmatpush2.xpose.msra.mxu0 0.0
    %124 = vmatprep.subr.mxu0 0.0
    %125 = vmatpush2.xpose.msra.mxu0 0.0
    %126 = vmatprep.subr.mxu0 0.0
    %127 = vmatpush2.xpose.msra.mxu0 0.0
    %128 = vmatprep.subr.mxu0 0.0
    %129 = vmatpush2.xpose.msra.mxu0 0.0
    %130 = vmatprep.subr.mxu0 0.0
    %131 = vmatpush2.xpose.msra.mxu0 0.0
    %132 = vmatprep.subr.mxu0 0.0
    %133 = vmatpush2.xpose.msra.mxu0 0.0
    %134 = vmatprep.subr.mxu0 0.0
    %135 = vmatpush2.xpose.msra.mxu0 0.0
    %136 = vmatprep.subr.mxu0 0.0
    %137 = vmatpush2.xpose.msra.mxu0 0.0
    %138 = vmatprep.subr.mxu0 0.0
    %139 = vmatpush2.xpose.msra.mxu0 0.0
    %140 = vmatprep.subr.mxu0 0.0
    %141 = vmatpush2.xpose.msra.mxu0 0.0
    %142 = vmatprep.subr.mxu0 0.0
    %143 = vmatpush2.xpose.msra.mxu0 0.0
    %144 = vmatprep.subr.mxu0 0.0
    %145 = vmatpush2.xpose.msra.mxu0 0.0
    %146 = vmatprep.mubr.f32.mxu0 %v42
    %147 = vmatmul.mubr.f32.gmra.mxu0 %v41
    %v148 = vpop.f32.mrf.mxu0
    %v149 = vadd.f32 %v80, %v148
    %v150 = vpop.f32.mrf.mxu0
    %151 = vdwg.mxu0
    %v152 = vxor.u32 %v149, 2147483648
    %v153 = vmul.f32 %v152, 1.442695
    %v154 = vpow.pop %v153
    %v155 = vadd.f32 %v154, 1.0
    %v156 = vrcp.pop %v155
    %v157 = vmul.f32 1.0, %v156
    %158 = vst [vmem:[#allocation7] sm:$0xff] %v157
    // Predicated region
    $region22: #{rbm_forward.1} parent=1 // pred_check
      _
    $region23: #{rbm_forward.1} parent=1 // pred_check_branch
      %160 = sbr.rel (0) target = $region25
    $region24: #{rbm_forward.1} parent=1 // pred_region
      %s162 = ssub.s32 128, 128
      %163 = vsyncadd [#allocation4], %s162
      %s165 = sshll.u32 [#allocation7], 4
      %s166 = int_to_ptr.vmem [resolvable:$true] %s165
      %168 = dma.vmem_to_hbm [thread:$0]  %s166, 128, %s3, [#allocation4]
    $region25: #{rbm_forward.1} parent=1 // pred_fallthru
      _
    // Predicated region
    $region26: #{rbm_forward.1} parent=1 // pred_check
      _
    $region27: #{rbm_forward.1} parent=1 // pred_check_branch
      %170 = sbr.rel (0) target = $region29
    $region28: #{rbm_forward.1} parent=1 // pred_region
      %171 = dma.done [#allocation4], 128
    $region29: #{rbm_forward.1} parent=1 // pred_fallthru
      _
    %172 = vsyncpa [#allocation3], 1
    %173 = vsyncpa [#allocation6], 1
    %174 = vsyncpa [#allocation4], 1

</llo_original>
